<compile_context>
chip_gen: v5e
topology: v5e:2x2
jax: 0.10.0
libtpu: 0.0.40
codegen_flags: <defaults>
</compile_context>

<pallas_src>
import jax
import jax.numpy as jnp
from jax.experimental import pallas as pl
from jax.experimental.pallas import tpu as pltpu


def _identity_kernel(x_ref, o_ref):
    # Whole-block VMEM copy; with input/output aliasing there is no second
    # HBM allocation, the writeback lands in the aliased buffer.
    o_ref[...] = x_ref[...]


def model_forward(x1: jax.Array) -> jax.Array:
    """Hot path of Model.forward: identity. No kernel launch, no DMA."""
    return x1


def model_forward_pallas(x1: jax.Array) -> jax.Array:
    """Identity via a minimal Pallas kernel boundary (gridless, aliased I/O)."""
    return pl.pallas_call(
        _identity_kernel,
        out_shape=jax.ShapeDtypeStruct(x1.shape, x1.dtype),
        in_specs=[pl.BlockSpec(memory_space=pltpu.MemorySpace.VMEM)],
        out_specs=pl.BlockSpec(memory_space=pltpu.MemorySpace.VMEM),
        input_output_aliases={0: 0},
    )(x1)


def init_params(key: jax.Array):
    """Deterministic init of the (unused) Linear(6, 2) params, mirroring __init__."""
    k_w, k_b = jax.random.split(key)
    bound = 1.0 / jnp.sqrt(6.0)  # PyTorch default: U(-1/sqrt(fan_in), 1/sqrt(fan_in))
    weight = jax.random.uniform(k_w, (2, 6), jnp.float32, -bound, bound)
    bias = jax.random.uniform(k_b, (2,), jnp.float32, -bound, bound)
    return {"linear": {"weight": weight, "bias": bias}}


if __name__ == "__main__":
    key = jax.random.PRNGKey(0)
    k_params, k_x = jax.random.split(key)

    params = init_params(k_params)  # parity with the module; unused in forward
    x1 = jax.random.normal(k_x, (2, 6), dtype=jnp.float32)

    # Hot path: pure identity, no kernel.
    out_fast = model_forward(x1)

    # Exercise the Pallas kernel boundary once.
    out_kernel = jax.block_until_ready(model_forward_pallas(x1))

    assert out_kernel.shape == (2, 6)
    assert out_kernel.dtype == jnp.float32
    assert bool(jnp.allclose(out_kernel, x1)), "identity (pallas) forward mismatch"
    assert bool(jnp.allclose(out_fast, x1)), "identity (direct) forward mismatch"

    print("KERNEL_OK")
</pallas_src>

<mosaic_0001>
module attributes {stable_mosaic.version = 11 : i64} {
  func.func @_identity_kernel(%arg0: memref<2x6xf32, #tpu.memory_space<vmem>>, %arg1: memref<2x6xf32, #tpu.memory_space<vmem>>) attributes {dimension_semantics = [], scalar_prefetch = 0 : i64, scratch_operands = 0 : i64, tpu.core_type = #tpu.core_type<tc>} {
    %c0 = arith.constant 0 : index
    %c0_0 = arith.constant 0 : index
    %0 = vector.load %arg0[%c0, %c0_0] : memref<2x6xf32, #tpu.memory_space<vmem>>, vector<2x6xf32>
    %c0_1 = arith.constant 0 : index
    %c0_2 = arith.constant 0 : index
    %1 = vector.load %arg1[%c0_1, %c0_2] : memref<2x6xf32, #tpu.memory_space<vmem>>, vector<2x6xf32>
    tpu.vector_store %arg1[%c0_1, %c0_2], %0 {strides = array<i32>} : memref<2x6xf32, #tpu.memory_space<vmem>>, vector<2x6xf32>,
    return
  }
}

</mosaic_0001>

<llo_original>
// kernel: tpu_custom_call.1
$region0: #{tpu_custom_call.1}
  #allocation0 [shape = 'u32[]', space=smem, size = 0x4, offset = 0x4, fixed_abs, tag = 'smem constant byte address 0x4 - core index']
  #allocation1 [shape = 'u32[72,128]{1,0:T(1,128)}', space=vmem, size = 0x9000, scoped, tag = 'internal scratch']
  %s0 = inlined_call_operand.hbm [shape: f32[2,6], index: 0, kind: input, shape index: {}, may-alias: {0,1}]
  %s1 = inlined_call_operand.hbm [shape: f32[2,6], index: 1, kind: output, shape index: {}, may-alias: {0,1}]
  %s2 = sld [smem:[#allocation0]]
  $region18: #{tpu_custom_call.1} parent=0
    _
  %s4 = ssub.s32 1, %s2
  %s5 = scalar_select 0, %s4, %s2
  $region1: #{tpu_custom_call.1} parent=0
    #allocation2 [shape = 'u8[1024]{0}', space=vmem, size = 0x400, scoped, tag = 'input window, operand 0, single buffered']
    #allocation3 [shape = 's32[1]{0}', space=sflag, size = 0x4, scoped, tag = 'scoped memory for tpu_custom_call.1']
    #allocation4 [shape = 's32[1]{0}', space=sflag, size = 0x4, scoped, tag = 'scoped memory for tpu_custom_call.1']
    #allocation5 [shape = 'u8[1024]{0}', space=vmem, size = 0x400, scoped, tag = 'output window, operand 0, single buffered']
    %6 = vsyncpa [#allocation3], 0
    %7 = vsyncpa [#allocation4], 0
    // Predicated region
    $region2: #{tpu_custom_call.1} parent=1 // pred_check
      _
    $region3: #{tpu_custom_call.1} parent=1 // pred_check_branch
      %9 = sbr.rel (0) target = $region5
    $region4: #{tpu_custom_call.1} parent=1 // pred_region
      %11 = vsyncadd [#allocation3], 0
      %s13 = sshll.u32 %s0, 4
      %s14 = int_to_ptr.hbm [resolvable:$true] %s13
      %s15 = sshll.u32 [#allocation2], 4
      %s16 = int_to_ptr.vmem [resolvable:$true] %s15
      %18 = dma.hbm_to_vmem [thread:$0]  %s14, 32, %s16, [#allocation3]
    $region5: #{tpu_custom_call.1} parent=1 // pred_fallthru
      _
    // Predicated region
    $region6: #{tpu_custom_call.1} parent=1 // pred_check
      _
    $region7: #{tpu_custom_call.1} parent=1 // pred_check_branch
      %20 = sbr.rel (0) target = $region9
    $region8: #{tpu_custom_call.1} parent=1 // pred_region
      %22 = dma.done [#allocation3], 32
    $region9: #{tpu_custom_call.1} parent=1 // pred_fallthru
      _
    %v23 = vld [vmem:[#allocation2] sm:$0x3]
    %vm24 = vcmask 41984
    %25 = vst.msk [vmem:[#allocation5] sm:$0x3] %vm24, %v23
    // Predicated region
    $region10: #{tpu_custom_call.1} parent=1 // pred_check
      _
    $region11: #{tpu_custom_call.1} parent=1 // pred_check_branch
      %27 = sbr.rel (0) target = $region13
    $region12: #{tpu_custom_call.1} parent=1 // pred_region
      %29 = vsyncadd [#allocation4], 0
      %s31 = sshll.u32 [#allocation5], 4
      %s32 = int_to_ptr.vmem [resolvable:$true] %s31
      %s33 = sshll.u32 %s1, 4
      %s34 = int_to_ptr.hbm [resolvable:$true] %s33
      %36 = dma.vmem_to_hbm [thread:$0]  %s32, 32, %s34, [#allocation4]
    $region13: #{tpu_custom_call.1} parent=1 // pred_fallthru
      _
    // Predicated region
    $region14: #{tpu_custom_call.1} parent=1 // pred_check
      _
    $region15: #{tpu_custom_call.1} parent=1 // pred_check_branch
      %38 = sbr.rel (0) target = $region17
    $region16: #{tpu_custom_call.1} parent=1 // pred_region
      %40 = dma.done [#allocation4], 32
    $region17: #{tpu_custom_call.1} parent=1 // pred_fallthru
      _
    %41 = vsyncpa [#allocation3], 1
    %42 = vsyncpa [#allocation4], 1

</llo_original>
